<compile_context>
chip_gen: v7x
topology: tpu7x:2x2x1
jax: 0.10.0
libtpu: 0.0.40
codegen_flags: <defaults>
</compile_context>

<pallas_src>
import functools

import jax
import jax.numpy as jnp
from jax import lax
from jax.experimental import pallas as pl
from jax.experimental.pallas import tpu as pltpu

EPS = 1e-5  # nn.GroupNorm default eps


def _group_sum_per_channel(v, groups, cpg):
    """v: (Cout, 1) per-channel sums -> (Cout, 1) where every channel carries
    the sum over its GroupNorm group.  Only touches tiny (cpg, 1) slices."""
    pieces = []
    for g in range(groups):
        s = jnp.sum(v[g * cpg:(g + 1) * cpg, :], axis=0, keepdims=True)  # (1,1)
        pieces.extend([s] * cpg)
    return jnp.concatenate(pieces, axis=0)                               # (Cout,1)


def _global_block_kernel(x_ref, p_ref, o_ref, *, W, cin):
    # x_ref : (SB, Cin, PHW)  raw samples, row-major H*W flattened, with a
    #                         (W+1)-zero border each side (PHW = H*W + 2W + 2)
    # p_ref : (Cout, 9*Cin + Cout + 4) packed parameter slab:
    #         [conv w (dx,dy,cin order) | SE w (out,in) | b | gamma | beta | se_b]
    # o_ref : (SB, Cout, H*W)  output in NCHW order, flattened spatial axis
    SB, Cout, HW = o_ref.shape
    cin3 = 3 * cin
    K = 9 * cin
    groups = Cout // 2           # module uses GroupNorm(cout // 2, cout)
    cpg = Cout // groups         # == 2 channels per group
    inv_cnt = 1.0 / float(cpg * HW)
    inv_hw = 1.0 / float(HW)

    # ---- unpack parameter slab (grid-invariant block -> DMA'd once) --------
    w_dx = [p_ref[:, j * cin3:(j + 1) * cin3] for j in range(3)]  # 3x (Cout,3Cin)
    sew = p_ref[:, K:K + Cout]                                    # (Cout, Cout)
    b = p_ref[:, K + Cout + 0:K + Cout + 1]                       # (Cout, 1)
    gamma = p_ref[:, K + Cout + 1:K + Cout + 2]
    beta = p_ref[:, K + Cout + 2:K + Cout + 3]
    seb = p_ref[:, K + Cout + 3:K + Cout + 4]

    # ---- column-wrap masks (depend only on the output x coord); hoisted ----
    xcol = lax.broadcasted_iota(jnp.int32, (1, HW), 1) % W
    ok_left = xcol >= 1          # dx = -1 taps need x-1 >= 0
    ok_right = xcol <= W - 2     # dx = +1 taps need x+1 <  W

    for s in range(SB):          # SB is small & static -> unrolled
        xs = x_ref[s]            # (Cin, PHW)

        # ---- 3x3 SAME conv: in-kernel im2col, 3 matmuls of K = 3*Cin -------
        # tap (dy, dx) sits at lane offset (dy+1)*W + (dx+1) of the padded
        # row-major input; the zero border covers row boundaries, the two
        # masks kill the column wrap-around.
        acc = None
        for j, dx in enumerate((-1, 0, 1)):
            cols = [xs[:, (dy + 1) * W + (dx + 1):(dy + 1) * W + (dx + 1) + HW]
                    for dy in (-1, 0, 1)]
            sub = jnp.concatenate(cols, axis=0)                  # (3*Cin, HW)
            if dx == -1:
                sub = jnp.where(ok_left, sub, 0.0)
            elif dx == 1:
                sub = jnp.where(ok_right, sub, 0.0)
            part = jnp.dot(w_dx[j], sub, preferred_element_type=jnp.float32)
            acc = part if acc is None else acc + part
        acc = acc + b                                            # (Cout, HW)

        # ---- GroupNorm: full-width two-pass stats + fused affine + ReLU ----
        ch_sum = jnp.sum(acc, axis=1, keepdims=True)             # (Cout, 1)
        mean = _group_sum_per_channel(ch_sum, groups, cpg) * inv_cnt
        ctr = acc - mean
        ch_ss = jnp.sum(ctr * ctr, axis=1, keepdims=True)        # (Cout, 1)
        var = _group_sum_per_channel(ch_ss, groups, cpg) * inv_cnt
        scale = gamma * lax.rsqrt(var + EPS)                     # (Cout, 1)
        y = jnp.maximum(ctr * scale + beta, 0.0)                 # (Cout, HW)

        # ---- SE block: global avg pool -> 1x1 conv -> sigmoid -> scale -----
        pooled = jnp.sum(y, axis=1, keepdims=True) * inv_hw      # (Cout, 1)
        gate = jax.nn.sigmoid(
            jnp.dot(sew, pooled, preferred_element_type=jnp.float32) + seb)

        # Lane-dense (HW-wide) direct store; already NCHW order.
        o_ref[s] = (y * gate).astype(o_ref.dtype)


def _samples_per_block(n):
    """Largest divisor of n that is <= min(8, max(1, n // 2)): amortizes the
    per-grid-step overhead while keeping >= 2 parallel steps for v7x."""
    target = max(1, min(8, n // 2))
    for sb in range(target, 0, -1):
        if n % sb == 0:
            return sb
    return 1


def global_block_forward(xs, params):
    """xs: list of NCHW arrays (as in the PyTorch module). Uses xs[-1]."""
    x = xs[-1]                                   # (N, Cin, H, W)
    N, Cin, H, W = x.shape
    conv_w, conv_b, gn_gamma, gn_beta, se_w, se_b = params
    Cout = conv_w.shape[0]
    HW = H * W
    K = 9 * Cin
    PHW = HW + 2 * W + 2                         # (W+1) zeros on each side

    # ---- glue (plain JAX, tiny HBM footprint): flatten + zero border -------
    xf = x.astype(jnp.float32).reshape(N, Cin, HW)
    xp = jnp.pad(xf, ((0, 0), (0, 0), (W + 1, W + 1)))          # (N, Cin, PHW)

    # conv weight packed (Cout, 9*Cin) with inner index order (dx, dy, cin)
    w_cm = jnp.transpose(conv_w.astype(jnp.float32), (0, 3, 2, 1)).reshape(Cout, K)
    sew = se_w.reshape(Cout, Cout).astype(jnp.float32)           # (out, in)
    small = jnp.stack([conv_b, gn_gamma, gn_beta, se_b], axis=1).astype(jnp.float32)
    slab = jnp.concatenate([w_cm, sew, small], axis=1)           # (Cout, K+Cout+4)

    SB = _samples_per_block(N)
    grid = (N // SB,)
    kernel = functools.partial(_global_block_kernel, W=W, cin=Cin)

    out_cm = pl.pallas_call(
        kernel,
        out_shape=jax.ShapeDtypeStruct((N, Cout, HW), jnp.float32),
        grid_spec=pltpu.PrefetchScalarGridSpec(
            num_scalar_prefetch=0,
            grid=grid,
            in_specs=[
                pl.BlockSpec((SB, Cin, PHW), lambda n: (n, 0, 0)),
                pl.BlockSpec((Cout, K + Cout + 4), lambda n: (0, 0)),
            ],
            out_specs=pl.BlockSpec((SB, Cout, HW), lambda n: (n, 0, 0)),
        ),
        compiler_params=pltpu.CompilerParams(
            dimension_semantics=("parallel",)),
    )(xp, slab)

    # Output is already channel-major NCHW: just un-flatten the spatial axis.
    return out_cm.reshape(N, Cout, H, W)


def _reference_forward(xs, params):
    """Pure-JAX reference reproducing the PyTorch semantics (for checking)."""
    x = xs[-1].astype(jnp.float32)
    conv_w, conv_b, gn_gamma, gn_beta, se_w, se_b = params
    N, Cin, H, W = x.shape
    Cout = conv_w.shape[0]
    groups = Cout // 2
    conv = lax.conv_general_dilated(
        x, conv_w.astype(jnp.float32), (1, 1), "SAME",
        dimension_numbers=("NCHW", "OIHW", "NCHW"))
    conv = conv + conv_b[None, :, None, None]
    g = conv.reshape(N, groups, Cout // groups, H, W)
    mean = g.mean(axis=(2, 3, 4), keepdims=True)
    var = g.var(axis=(2, 3, 4), keepdims=True)
    gn = (g - mean) / jnp.sqrt(var + EPS)
    gn = gn.reshape(N, Cout, H, W) * gn_gamma[None, :, None, None] \
        + gn_beta[None, :, None, None]
    r = jnp.maximum(gn, 0.0)
    pooled = r.mean(axis=(2, 3))                                     # (N, Cout)
    gate = jax.nn.sigmoid(pooled @ se_w.reshape(Cout, Cout).T + se_b)
    return r * gate[:, :, None, None]


if __name__ == "__main__":
    # feat = [Cout, ..., Cin]  (global_block uses feat[-1] -> feat[0])
    feat = [8, 16]
    Cin, Cout = feat[-1], feat[0]
    N, H, W = 2, 16, 16

    key = jax.random.PRNGKey(0)
    ks = jax.random.split(key, 7)
    conv_w = jax.random.normal(ks[0], (Cout, Cin, 3, 3), jnp.float32) * 0.1
    conv_b = jax.random.normal(ks[1], (Cout,), jnp.float32) * 0.1
    gn_gamma = 1.0 + 0.1 * jax.random.normal(ks[2], (Cout,), jnp.float32)
    gn_beta = 0.1 * jax.random.normal(ks[3], (Cout,), jnp.float32)
    se_w = jax.random.normal(ks[4], (Cout, Cout, 1, 1), jnp.float32) * 0.1
    se_b = jax.random.normal(ks[5], (Cout,), jnp.float32) * 0.1
    params = (conv_w, conv_b, gn_gamma, gn_beta, se_w, se_b)

    x_last = jax.random.normal(ks[6], (N, Cin, H, W), jnp.float32)
    xs = [x_last]  # the module only consumes xs[-1]

    out = global_block_forward(xs, params)
    out = jax.block_until_ready(out)

    ref = jax.block_until_ready(_reference_forward(xs, params))
    assert out.shape == (N, Cout, H, W)
    assert jnp.allclose(out, ref, rtol=1e-4, atol=1e-4), \
        f"max abs err = {jnp.max(jnp.abs(out - ref))}"

    print("KERNEL_OK")
</pallas_src>

<mosaic_0001>
module attributes {stable_mosaic.version = 11 : i64} {
  func.func @_global_block_kernel(%arg0: i32, %arg1: memref<1x16x290xf32, #tpu.memory_space<vmem>>, %arg2: memref<8x156xf32, #tpu.memory_space<vmem>>, %arg3: memref<1x8x256xf32, #tpu.memory_space<vmem>>) attributes {dimension_semantics = [#tpu.dimension_semantics<parallel>], iteration_bounds = array<i64: 2>, scalar_prefetch = 0 : i64, scratch_operands = 0 : i64, tpu.core_type = #tpu.core_type<tc>, window_params = [{transform_indices = @transform_0, window_bounds = array<i64: 1, 16, 290>}, {pipeline_mode = #tpu.pipeline_mode<synchronous>, transform_indices = @transform_1, window_bounds = array<i64: 8, 156>}, {transform_indices = @transform_2, window_bounds = array<i64: 1, 8, 256>}]} {
    %c0 = arith.constant 0 : index
    %c0_0 = arith.constant 0 : index
    %0 = vector.load %arg2[%c0, %c0_0] : memref<8x156xf32, #tpu.memory_space<vmem>>, vector<8x48xf32>
    %c0_1 = arith.constant 0 : index
    %c48 = arith.constant 48 : index
    %1 = vector.load %arg2[%c0_1, %c48] : memref<8x156xf32, #tpu.memory_space<vmem>>, vector<8x48xf32>
    %c0_2 = arith.constant 0 : index
    %c96 = arith.constant 96 : index
    %2 = vector.load %arg2[%c0_2, %c96] : memref<8x156xf32, #tpu.memory_space<vmem>>, vector<8x48xf32>
    %c0_3 = arith.constant 0 : index
    %c144 = arith.constant 144 : index
    %3 = vector.load %arg2[%c0_3, %c144] : memref<8x156xf32, #tpu.memory_space<vmem>>, vector<8x8xf32>
    %c0_4 = arith.constant 0 : index
    %c152 = arith.constant 152 : index
    %4 = vector.load %arg2[%c0_4, %c152] : memref<8x156xf32, #tpu.memory_space<vmem>>, vector<8x1xf32>
    %c0_5 = arith.constant 0 : index
    %c153 = arith.constant 153 : index
    %5 = vector.load %arg2[%c0_5, %c153] : memref<8x156xf32, #tpu.memory_space<vmem>>, vector<8x1xf32>
    %c0_6 = arith.constant 0 : index
    %c154 = arith.constant 154 : index
    %6 = vector.load %arg2[%c0_6, %c154] : memref<8x156xf32, #tpu.memory_space<vmem>>, vector<8x1xf32>
    %c0_7 = arith.constant 0 : index
    %c155 = arith.constant 155 : index
    %7 = vector.load %arg2[%c0_7, %c155] : memref<8x156xf32, #tpu.memory_space<vmem>>, vector<8x1xf32>
    %8 = tpu.iota {dimensions = array<i32: 1>} : vector<1x256xi32>
    %c16_i32 = arith.constant 16 : i32
    %c0_i32 = arith.constant 0 : i32
    %9 = arith.cmpi eq, %c16_i32, %c0_i32 : i32
    %c1_i32 = arith.constant 1 : i32
    %10 = arith.select %9, %c1_i32, %c16_i32 : i32
    %11 = vector.broadcast %10 : i32 to vector<1x256xi32>
    %12 = arith.remsi %8, %11 : vector<1x256xi32>
    %c0_i32_8 = arith.constant 0 : i32
    %13 = vector.broadcast %c0_i32_8 : i32 to vector<1x256xi32>
    %14 = arith.cmpi ne, %12, %13 : vector<1x256xi32>
    %c0_i32_9 = arith.constant 0 : i32
    %15 = vector.broadcast %c0_i32_9 : i32 to vector<1x256xi32>
    %16 = arith.cmpi slt, %12, %15 : vector<1x256xi32>
    %c0_i32_10 = arith.constant 0 : i32
    %17 = arith.cmpi slt, %10, %c0_i32_10 : i32
    %18 = vector.broadcast %17 : i1 to vector<1x256xi1>
    %19 = vector.broadcast %18 : vector<1x256xi1> to vector<1x256xi1>
    %20 = arith.xori %16, %19 : vector<1x256xi1>
    %21 = arith.andi %20, %14 : vector<1x256xi1>
    %22 = vector.broadcast %10 : i32 to vector<1x256xi32>
    %23 = arith.addi %12, %22 : vector<1x256xi32>
    %24 = arith.select %21, %23, %12 : vector<1x256xi1>, vector<1x256xi32>
    %c1_i32_11 = arith.constant 1 : i32
    %25 = vector.broadcast %c1_i32_11 : i32 to vector<1x256xi32>
    %26 = arith.cmpi sge, %24, %25 : vector<1x256xi32>
    %c14_i32 = arith.constant 14 : i32
    %27 = vector.broadcast %c14_i32 : i32 to vector<1x256xi32>
    %28 = arith.cmpi sle, %24, %27 : vector<1x256xi32>
    %c0_12 = arith.constant 0 : index
    %c0_13 = arith.constant 0 : index
    %c0_14 = arith.constant 0 : index
    %29 = vector.load %arg1[%c0_12, %c0_13, %c0_14] : memref<1x16x290xf32, #tpu.memory_space<vmem>>, vector<1x16x290xf32>
    %30 = vector.shape_cast %29 : vector<1x16x290xf32> to vector<16x290xf32>
    %31 = vector.extract_strided_slice %30 {offsets = [0, 0], sizes = [16, 256], strides = [1, 1]} : vector<16x290xf32> to vector<16x256xf32>
    %32 = vector.extract_strided_slice %30 {offsets = [0, 16], sizes = [16, 256], strides = [1, 1]} : vector<16x290xf32> to vector<16x256xf32>
    %33 = vector.extract_strided_slice %30 {offsets = [0, 32], sizes = [16, 256], strides = [1, 1]} : vector<16x290xf32> to vector<16x256xf32>
    %34 = tpu.concatenate %31, %32, %33 in 0 : vector<16x256xf32>, vector<16x256xf32>, vector<16x256xf32> -> vector<48x256xf32>
    %cst = arith.constant 0.000000e+00 : f32
    %35 = vector.shape_cast %26 : vector<1x256xi1> to vector<1x256xi1>
    %36 = vector.broadcast %35 : vector<1x256xi1> to vector<48x256xi1>
    %37 = vector.broadcast %cst : f32 to vector<48x256xf32>
    %38 = arith.select %36, %34, %37 : vector<48x256xi1>, vector<48x256xf32>
    %cst_15 = arith.constant dense<0.000000e+00> : vector<8x256xf32>
    %39 = tpu.matmul %0, %38, %cst_15 {dimension_numbers = #tpu.dot_dimension_numbers<[1], [0], [0], [1], [0, 0, 1, 1], [], []>} : vector<8x48xf32>, vector<48x256xf32>, vector<8x256xf32> -> vector<8x256xf32>
    %40 = vector.extract_strided_slice %30 {offsets = [0, 1], sizes = [16, 256], strides = [1, 1]} : vector<16x290xf32> to vector<16x256xf32>
    %41 = vector.extract_strided_slice %30 {offsets = [0, 17], sizes = [16, 256], strides = [1, 1]} : vector<16x290xf32> to vector<16x256xf32>
    %42 = vector.extract_strided_slice %30 {offsets = [0, 33], sizes = [16, 256], strides = [1, 1]} : vector<16x290xf32> to vector<16x256xf32>
    %43 = tpu.concatenate %40, %41, %42 in 0 : vector<16x256xf32>, vector<16x256xf32>, vector<16x256xf32> -> vector<48x256xf32>
    %cst_16 = arith.constant dense<0.000000e+00> : vector<8x256xf32>
    %44 = tpu.matmul %1, %43, %cst_16 {dimension_numbers = #tpu.dot_dimension_numbers<[1], [0], [0], [1], [0, 0, 1, 1], [], []>} : vector<8x48xf32>, vector<48x256xf32>, vector<8x256xf32> -> vector<8x256xf32>
    %45 = arith.addf %39, %44 : vector<8x256xf32>
    %46 = vector.extract_strided_slice %30 {offsets = [0, 2], sizes = [16, 256], strides = [1, 1]} : vector<16x290xf32> to vector<16x256xf32>
    %47 = vector.extract_strided_slice %30 {offsets = [0, 18], sizes = [16, 256], strides = [1, 1]} : vector<16x290xf32> to vector<16x256xf32>
    %48 = vector.extract_strided_slice %30 {offsets = [0, 34], sizes = [16, 256], strides = [1, 1]} : vector<16x290xf32> to vector<16x256xf32>
    %49 = tpu.concatenate %46, %47, %48 in 0 : vector<16x256xf32>, vector<16x256xf32>, vector<16x256xf32> -> vector<48x256xf32>
    %cst_17 = arith.constant 0.000000e+00 : f32
    %50 = vector.shape_cast %28 : vector<1x256xi1> to vector<1x256xi1>
    %51 = vector.broadcast %50 : vector<1x256xi1> to vector<48x256xi1>
    %52 = vector.broadcast %cst_17 : f32 to vector<48x256xf32>
    %53 = arith.select %51, %49, %52 : vector<48x256xi1>, vector<48x256xf32>
    %cst_18 = arith.constant dense<0.000000e+00> : vector<8x256xf32>
    %54 = tpu.matmul %2, %53, %cst_18 {dimension_numbers = #tpu.dot_dimension_numbers<[1], [0], [0], [1], [0, 0, 1, 1], [], []>} : vector<8x48xf32>, vector<48x256xf32>, vector<8x256xf32> -> vector<8x256xf32>
    %55 = arith.addf %45, %54 : vector<8x256xf32>
    %56 = vector.broadcast %4 : vector<8x1xf32> to vector<8x256xf32>
    %57 = arith.addf %55, %56 : vector<8x256xf32>
    %cst_19 = arith.constant dense<0.000000e+00> : vector<8xf32>
    %58 = vector.multi_reduction <add>, %57, %cst_19 [1] : vector<8x256xf32> to vector<8xf32>
    %59 = vector.shape_cast %58 : vector<8xf32> to vector<8x1xf32>
    %60 = vector.extract_strided_slice %59 {offsets = [0, 0], sizes = [2, 1], strides = [1, 1]} : vector<8x1xf32> to vector<2x1xf32>
    %cst_20 = arith.constant dense<0.000000e+00> : vector<1xf32>
    %61 = vector.multi_reduction <add>, %60, %cst_20 [0] : vector<2x1xf32> to vector<1xf32>
    %62 = vector.shape_cast %61 : vector<1xf32> to vector<1x1xf32>
    %63 = vector.extract_strided_slice %59 {offsets = [2, 0], sizes = [2, 1], strides = [1, 1]} : vector<8x1xf32> to vector<2x1xf32>
    %cst_21 = arith.constant dense<0.000000e+00> : vector<1xf32>
    %64 = vector.multi_reduction <add>, %63, %cst_21 [0] : vector<2x1xf32> to vector<1xf32>
    %65 = vector.shape_cast %64 : vector<1xf32> to vector<1x1xf32>
    %66 = vector.extract_strided_slice %59 {offsets = [4, 0], sizes = [2, 1], strides = [1, 1]} : vector<8x1xf32> to vector<2x1xf32>
    %cst_22 = arith.constant dense<0.000000e+00> : vector<1xf32>
    %67 = vector.multi_reduction <add>, %66, %cst_22 [0] : vector<2x1xf32> to vector<1xf32>
    %68 = vector.shape_cast %67 : vector<1xf32> to vector<1x1xf32>
    %69 = vector.extract_strided_slice %59 {offsets = [6, 0], sizes = [2, 1], strides = [1, 1]} : vector<8x1xf32> to vector<2x1xf32>
    %cst_23 = arith.constant dense<0.000000e+00> : vector<1xf32>
    %70 = vector.multi_reduction <add>, %69, %cst_23 [0] : vector<2x1xf32> to vector<1xf32>
    %71 = vector.shape_cast %70 : vector<1xf32> to vector<1x1xf32>
    %72 = tpu.concatenate %62, %62, %65, %65, %68, %68, %71, %71 in 0 : vector<1x1xf32>, vector<1x1xf32>, vector<1x1xf32>, vector<1x1xf32>, vector<1x1xf32>, vector<1x1xf32>, vector<1x1xf32>, vector<1x1xf32> -> vector<8x1xf32>
    %cst_24 = arith.constant 0.001953125 : f32
    %73 = vector.broadcast %cst_24 : f32 to vector<8x1xf32>
    %74 = arith.mulf %72, %73 : vector<8x1xf32>
    %75 = vector.broadcast %74 : vector<8x1xf32> to vector<8x256xf32>
    %76 = arith.subf %57, %75 : vector<8x256xf32>
    %77 = arith.mulf %76, %76 : vector<8x256xf32>
    %cst_25 = arith.constant dense<0.000000e+00> : vector<8xf32>
    %78 = vector.multi_reduction <add>, %77, %cst_25 [1] : vector<8x256xf32> to vector<8xf32>
    %79 = vector.shape_cast %78 : vector<8xf32> to vector<8x1xf32>
    %80 = vector.extract_strided_slice %79 {offsets = [0, 0], sizes = [2, 1], strides = [1, 1]} : vector<8x1xf32> to vector<2x1xf32>
    %cst_26 = arith.constant dense<0.000000e+00> : vector<1xf32>
    %81 = vector.multi_reduction <add>, %80, %cst_26 [0] : vector<2x1xf32> to vector<1xf32>
    %82 = vector.shape_cast %81 : vector<1xf32> to vector<1x1xf32>
    %83 = vector.extract_strided_slice %79 {offsets = [2, 0], sizes = [2, 1], strides = [1, 1]} : vector<8x1xf32> to vector<2x1xf32>
    %cst_27 = arith.constant dense<0.000000e+00> : vector<1xf32>
    %84 = vector.multi_reduction <add>, %83, %cst_27 [0] : vector<2x1xf32> to vector<1xf32>
    %85 = vector.shape_cast %84 : vector<1xf32> to vector<1x1xf32>
    %86 = vector.extract_strided_slice %79 {offsets = [4, 0], sizes = [2, 1], strides = [1, 1]} : vector<8x1xf32> to vector<2x1xf32>
    %cst_28 = arith.constant dense<0.000000e+00> : vector<1xf32>
    %87 = vector.multi_reduction <add>, %86, %cst_28 [0] : vector<2x1xf32> to vector<1xf32>
    %88 = vector.shape_cast %87 : vector<1xf32> to vector<1x1xf32>
    %89 = vector.extract_strided_slice %79 {offsets = [6, 0], sizes = [2, 1], strides = [1, 1]} : vector<8x1xf32> to vector<2x1xf32>
    %cst_29 = arith.constant dense<0.000000e+00> : vector<1xf32>
    %90 = vector.multi_reduction <add>, %89, %cst_29 [0] : vector<2x1xf32> to vector<1xf32>
    %91 = vector.shape_cast %90 : vector<1xf32> to vector<1x1xf32>
    %92 = tpu.concatenate %82, %82, %85, %85, %88, %88, %91, %91 in 0 : vector<1x1xf32>, vector<1x1xf32>, vector<1x1xf32>, vector<1x1xf32>, vector<1x1xf32>, vector<1x1xf32>, vector<1x1xf32>, vector<1x1xf32> -> vector<8x1xf32>
    %cst_30 = arith.constant 0.001953125 : f32
    %93 = vector.broadcast %cst_30 : f32 to vector<8x1xf32>
    %94 = arith.mulf %92, %93 : vector<8x1xf32>
    %cst_31 = arith.constant 9.99999974E-6 : f32
    %95 = vector.broadcast %cst_31 : f32 to vector<8x1xf32>
    %96 = arith.addf %94, %95 : vector<8x1xf32>
    %97 = math.rsqrt %96 : vector<8x1xf32>
    %98 = arith.mulf %5, %97 : vector<8x1xf32>
    %99 = vector.broadcast %98 : vector<8x1xf32> to vector<8x256xf32>
    %100 = arith.mulf %76, %99 : vector<8x256xf32>
    %101 = vector.broadcast %6 : vector<8x1xf32> to vector<8x256xf32>
    %102 = arith.addf %100, %101 : vector<8x256xf32>
    %cst_32 = arith.constant 0.000000e+00 : f32
    %103 = vector.broadcast %cst_32 : f32 to vector<8x256xf32>
    %104 = arith.maximumf %102, %103 : vector<8x256xf32>
    %cst_33 = arith.constant dense<0.000000e+00> : vector<8xf32>
    %105 = vector.multi_reduction <add>, %104, %cst_33 [1] : vector<8x256xf32> to vector<8xf32>
    %106 = vector.shape_cast %105 : vector<8xf32> to vector<8x1xf32>
    %cst_34 = arith.constant 3.906250e-03 : f32
    %107 = vector.broadcast %cst_34 : f32 to vector<8x1xf32>
    %108 = arith.mulf %106, %107 : vector<8x1xf32>
    %cst_35 = arith.constant dense<0.000000e+00> : vector<8x1xf32>
    %109 = tpu.matmul %3, %108, %cst_35 {dimension_numbers = #tpu.dot_dimension_numbers<[1], [0], [0], [1], [0, 0, 1, 1], [], []>} : vector<8x8xf32>, vector<8x1xf32>, vector<8x1xf32> -> vector<8x1xf32>
    %110 = arith.addf %109, %7 : vector<8x1xf32>
    %111 = arith.negf %110 : vector<8x1xf32>
    %112 = math.exp %111 : vector<8x1xf32>
    %cst_36 = arith.constant 1.000000e+00 : f32
    %113 = vector.broadcast %cst_36 : f32 to vector<8x1xf32>
    %114 = arith.addf %113, %112 : vector<8x1xf32>
    %115 = arith.divf %113, %114 : vector<8x1xf32>
    %116 = vector.broadcast %115 : vector<8x1xf32> to vector<8x256xf32>
    %117 = arith.mulf %104, %116 : vector<8x256xf32>
    %c0_37 = arith.constant 0 : index
    %c0_38 = arith.constant 0 : index
    %c0_39 = arith.constant 0 : index
    %118 = vector.load %arg3[%c0_37, %c0_38, %c0_39] : memref<1x8x256xf32, #tpu.memory_space<vmem>>, vector<1x8x256xf32>
    %119 = vector.shape_cast %118 : vector<1x8x256xf32> to vector<8x256xf32>
    %120 = vector.shape_cast %117 : vector<8x256xf32> to vector<1x8x256xf32>
    tpu.vector_store %arg3[%c0_37, %c0_38, %c0_39], %120 {strides = array<i32>} : memref<1x8x256xf32, #tpu.memory_space<vmem>>, vector<1x8x256xf32>,
    return
  }
  func.func @transform_0(%arg0: i32) -> (i32, i32, i32) {
    %c0_i32 = arith.constant 0 : i32
    %c0_i32_0 = arith.constant 0 : i32
    %c0_i32_1 = arith.constant 0 : i32
    return %arg0, %c0_i32, %c0_i32_0 : i32, i32, i32
  }
  func.func @transform_1(%arg0: i32) -> (i32, i32) {
    %c0_i32 = arith.constant 0 : i32
    %c0_i32_0 = arith.constant 0 : i32
    %c0_i32_1 = arith.constant 0 : i32
    return %c0_i32, %c0_i32_0 : i32, i32
  }
  func.func @transform_2(%arg0: i32) -> (i32, i32, i32) {
    %c0_i32 = arith.constant 0 : i32
    %c0_i32_0 = arith.constant 0 : i32
    %c0_i32_1 = arith.constant 0 : i32
    return %arg0, %c0_i32, %c0_i32_0 : i32, i32, i32
  }
}

</mosaic_0001>

<llo_original>
// kernel: tpu_custom_call.1
$region0: #{tpu_custom_call.1}
  #allocation0 [shape = 'u32[]', space=smem, size = 0x4, offset = 0x4, fixed_abs, tag = 'smem constant byte address 0x4 - core index']
  #allocation1 [shape = 'u32[144,128]{1,0:T(1,128)}', space=vmem, size = 0x12000, scoped, tag = 'internal scratch']
  %s0 = inlined_call_operand.hbm [shape: f32[2,16,290], index: 0, kind: input, shape index: {}]
  %s1 = inlined_call_operand.hbm [shape: f32[8,156], index: 1, kind: input, shape index: {}]
  %s2 = inlined_call_operand.hbm [shape: f32[2,8,256], index: 2, kind: output, shape index: {}]
  %s3 = sld [smem:[#allocation0]]
  $region49: #{tpu_custom_call.1} parent=0
    _
  %s5 = ssub.s32 1, %s3
  %s6 = scalar_select 0, %s5, %s3
  $region1: #{tpu_custom_call.1} parent=0
    #allocation2 [shape = 'u8[49152]{0}', space=vmem, size = 0xc000, scoped, tag = 'input window, operand 0']
    #allocation3 [shape = 's32[2]{0}', space=sflag, size = 0x8, scoped, tag = 'scoped memory for tpu_custom_call.1']
    #allocation4 [shape = 's32[2]{0}', space=sflag, size = 0x8, scoped, tag = 'scoped memory for tpu_custom_call.1']
    #allocation5 [shape = 'u8[8192]{0}', space=vmem, size = 0x2000, scoped, tag = 'input window, operand 1, single buffered']
    #allocation6 [shape = 's32[1]{0}', space=sflag, size = 0x4, scoped, tag = 'scoped memory for tpu_custom_call.1']
    #allocation7 [shape = 'u8[16384]{0}', space=vmem, size = 0x4000, scoped, tag = 'output window, operand 0']
    %7 = vsyncpa [#allocation3], 0
    %s8 = scalar_lea.sflag [#allocation3], 1
    %9 = vsyncpa %s8, 0
    %10 = vsyncpa [#allocation6], 0
    %11 = vsyncpa [#allocation4], 0
    %s12 = scalar_lea.sflag [#allocation4], 1
    %13 = vsyncpa %s12, 0
    loop: start=0, step=1, limit=4
    $region2: #{tpu_custom_call.1} parent=1 // loop_pre_header
      _
    $region3: #{tpu_custom_call.1} parent=1 // loop_header
      %s15 = sphi 0, %s19
      %p16 = scmp.ge.s32.totalorder %s15, 4
      %s25 = sphi 0, %s27
      %s28 = sphi 0, %s25
      %s29 = sphi 0, %s28
      %s45 = sphi 0, %s29
      %s49 = sphi 0, %s49
      %s51 = sphi 0, %s49
      %s52 = sphi 0, %s51
      %s66 = sphi 0, %s52
      %s72 = sphi 0, %s74
      %s75 = sphi 0, %s72
      %s76 = sphi 0, %s75
      %s92 = sphi 0, %s76
    $region4: #{tpu_custom_call.1} parent=1 // loop_header_branch
      %18 = sbr.rel (%p16) target = $region8
    $region5: #{tpu_custom_call.1} parent=1 // loop_body
      %s20 = ssub.s32 %s15, 1
      %s21 = ssub.s32 %s15, 2
      %s22 = sadd.s32 %s15, 1
      %s23 = ssub.s32 %s15, %s22
      %p24 = scmp.eq.s32.totalorder %s23, 0
      %s26 = sadd.s32 %s25, 1
      %s27 = scalar_select %p24, %s25, %s26
      %p30 = pneg %p24
      %p31 = scmp.eq.s32.totalorder %s15, 1
      %p32 = por %p30, %p31
      %p33 = scmp.ne.s32.totalorder %s25, %s28
      %p34 = scmp.eq.s32.totalorder %s15, 0
      %p35 = por %p33, %p34
      %p36 = scmp.ne.s32.totalorder %s25, %s28
      %p37 = scmp.eq.s32.totalorder %s20, 1
      %p38 = por %p36, %p37
      %p39 = scmp.ne.s32.totalorder %s28, %s29
      %p40 = scmp.eq.s32.totalorder %s20, 0
      %p41 = por %p39, %p40
      %p42 = scmp.ne.s32.totalorder %s28, %s29
      %p43 = scmp.eq.s32.totalorder %s21, 1
      %p44 = por %p42, %p43
      %p46 = scmp.ne.s32.totalorder %s29, %s45
      %p47 = scmp.eq.s32.totalorder %s21, 0
      %p48 = por %p46, %p47
      %s50 = sadd.s32 %s49, 1
      %p53 = scmp.eq.s32.totalorder %s15, 1
      %p54 = scmp.ne.s32.totalorder %s49, %s51
      %p55 = scmp.eq.s32.totalorder %s15, 0
      %p56 = por %p54, %p55
      %p57 = scmp.ne.s32.totalorder %s49, %s51
      %p58 = scmp.eq.s32.totalorder %s20, 1
      %p59 = por %p57, %p58
      %p60 = scmp.ne.s32.totalorder %s51, %s52
      %p61 = scmp.eq.s32.totalorder %s20, 0
      %p62 = por %p60, %p61
      %p63 = scmp.ne.s32.totalorder %s51, %s52
      %p64 = scmp.eq.s32.totalorder %s21, 1
      %p65 = por %p63, %p64
      %p67 = scmp.ne.s32.totalorder %s52, %s66
      %p68 = scmp.eq.s32.totalorder %s21, 0
      %p69 = por %p67, %p68
      %s70 = ssub.s32 %s15, %s22
      %p71 = scmp.eq.s32.totalorder %s70, 0
      %s73 = sadd.s32 %s72, 1
      %s74 = scalar_select %p71, %s72, %s73
      %p77 = pneg %p71
      %p78 = scmp.eq.s32.totalorder %s15, 1
      %p79 = por %p77, %p78
      %p80 = scmp.ne.s32.totalorder %s72, %s75
      %p81 = scmp.eq.s32.totalorder %s15, 0
      %p82 = por %p80, %p81
      %p83 = scmp.ne.s32.totalorder %s72, %s75
      %p84 = scmp.eq.s32.totalorder %s20, 1
      %p85 = por %p83, %p84
      %p86 = scmp.ne.s32.totalorder %s75, %s76
      %p87 = scmp.eq.s32.totalorder %s20, 0
      %p88 = por %p86, %p87
      %p89 = scmp.ne.s32.totalorder %s75, %s76
      %p90 = scmp.eq.s32.totalorder %s21, 1
      %p91 = por %p89, %p90
      %p93 = scmp.ne.s32.totalorder %s76, %s92
      %p94 = scmp.eq.s32.totalorder %s21, 0
      %p95 = por %p93, %p94
      %p96 = scmp.le.s32.totalorder 1, %s15
      %p97 = scmp.lt.s32.totalorder %s15, 3
      %p98 = pnand %p96, %p97
      %p99 = pneg %p98
      // Predicated region
      $region9: #{tpu_custom_call.1} parent=5 // pred_check
        _
      $region10: #{tpu_custom_call.1} parent=5 // pred_check_branch
        %101 = sbr.rel (%p98) target = $region12
      $region11: #{tpu_custom_call.1} parent=5 // pred_region
        %s102 = ssub.s32 %s15, 1
        // Predicated region
        $region13: #{tpu_custom_call.1} parent=11 // pred_check
          %p103 = pneg %p62
        $region14: #{tpu_custom_call.1} parent=11 // pred_check_branch
          %105 = sbr.rel (%p103) target = $region16
        $region15: #{tpu_custom_call.1} parent=11 // pred_region
          %s107 = ssub.s32 256, 256
          %108 = vsyncadd [#allocation6], %s107
          %s110 = sshll.u32 [#allocation5], 4
          %s111 = int_to_ptr.vmem [resolvable:$true] %s110
          %113 = dma.hbm_to_vmem [thread:$0]  %s1, 256, %s111, [#allocation6]
        $region16: #{tpu_custom_call.1} parent=11 // pred_fallthru
          _
      $region12: #{tpu_custom_call.1} parent=5 // pred_fallthru
        _
      %p114 = scmp.lt.s32.totalorder %s15, 2
      // Predicated region
      $region17: #{tpu_custom_call.1} parent=5 // pred_check
        %p115 = pneg %p114
      $region18: #{tpu_custom_call.1} parent=5 // pred_check_branch
        %117 = sbr.rel (%p115) target = $region20
      $region19: #{tpu_custom_call.1} parent=5 // pred_region
        // Predicated region
        $region21: #{tpu_custom_call.1} parent=19 // pred_check
          %p118 = pneg %p35
        $region22: #{tpu_custom_call.1} parent=19 // pred_check_branch
          %120 = sbr.rel (%p118) target = $region24
        $region23: #{tpu_custom_call.1} parent=19 // pred_region
          %s121 = sand.u32 %s25, 1
          %s122 = scalar_lea.sflag [#allocation3], %s121
          %s123 = sand.u32 %s25, 1
          %s124 = smul.addr %s123, 48
          %s125 = scalar_lea.vmem [#allocation2], %s124
          %s127 = ssub.s32 768, 768
          %128 = vsyncadd %s122, %s127
          %s129 = smul.addr %s15, 6
          %s130 = smul.addr %s129, 128
          %s131 = scalar_lea.hbm %s0, %s130
          %s132 = sshll.u32 %s125, 4
          %s133 = int_to_ptr.vmem [resolvable:$true] %s132
          %138 = dma.hbm_to_vmem [thread:$0]  %s131, 768, %s133, %s122, 384, 384, 24
        $region24: #{tpu_custom_call.1} parent=19 // pred_fallthru
          _
      $region20: #{tpu_custom_call.1} parent=5 // pred_fallthru
        _
      %p139 = scmp.le.s32.totalorder 1, %s15
      %p140 = scmp.lt.s32.totalorder %s15, 3
      %p141 = pnand %p139, %p140
      %p142 = pneg %p141
      // Predicated region
      $region25: #{tpu_custom_call.1} parent=5 // pred_check
        _
      $region26: #{tpu_custom_call.1} parent=5 // pred_check_branch
        %144 = sbr.rel (%p141) target = $region28
      $region27: #{tpu_custom_call.1} parent=5 // pred_region
        %s145 = ssub.s32 %s15, 1
        %s146 = sand.u32 %s28, 1
        %s147 = scalar_lea.sflag [#allocation3], %s146
        %s148 = sand.u32 %s28, 1
        %s149 = smul.addr %s148, 48
        %s150 = scalar_lea.vmem [#allocation2], %s149
        // Predicated region
        $region29: #{tpu_custom_call.1} parent=27 // pred_check
          %p151 = pneg %p41
        $region30: #{tpu_custom_call.1} parent=27 // pred_check_branch
          %153 = sbr.rel (%p151) target = $region32
        $region31: #{tpu_custom_call.1} parent=27 // pred_region
          %154 = dma.done %s147, 768
        $region32: #{tpu_custom_call.1} parent=27 // pred_fallthru
          _
        // Predicated region
        $region33: #{tpu_custom_call.1} parent=27 // pred_check
          %p155 = pneg %p62
        $region34: #{tpu_custom_call.1} parent=27 // pred_check_branch
          %157 = sbr.rel (%p155) target = $region36
        $region35: #{tpu_custom_call.1} parent=27 // pred_region
          %158 = dma.done [#allocation6], 256
        $region36: #{tpu_custom_call.1} parent=27 // pred_fallthru
          _
        %s159 = sand.u32 %s28, 1
        %s160 = scalar_lea.sflag [#allocation3], %s159
        %s161 = sand.u32 %s28, 1
        %s162 = smul.addr %s161, 48
        %s163 = scalar_lea.vmem [#allocation2], %s162
        %p164 = pneg %p41
        %p165 = pneg %p38
        %p166 = pneg %p62
        %p167 = pneg %p59
        %p168 = pneg %p88
        %p169 = pneg %p85
        %s170 = sand.u32 %s75, 1
        %s171 = scalar_lea.sflag [#allocation4], %s170
        %s172 = sand.u32 %s75, 1
        %s173 = smul.addr %s172, 16
        %s174 = scalar_lea.vmem [#allocation7], %s173
        %v175 = vld [vmem:[#allocation5] sm:$0xff]
        %v176 = vld [vmem:[#allocation5 + $0x8] sm:$0xff]
        %v177 = vlaneseq
        %v178 = vand.u32 %v177, 127
        %v179 = vadd.s32 %v178, 128
        %vm180 = vcmp.lt.s32.totalorder %v178, 0
        %v181 = vsub.s32 0, %v178
        %v182 = vsel %vm180, %v181, %v178
        %v183 = vshrl.u32 %v182, 4
        %v184 = vand.u32 %v182, 15
        %v185 = vsub.s32 0, %v184
        %v186 = vsel %vm180, %v185, %v184
        %vm187 = vcmp.lt.s32.totalorder %v179, 0
        %v188 = vsub.s32 0, %v179
        %v189 = vsel %vm187, %v188, %v179
        %v190 = vshrl.u32 %v189, 4
        %v191 = vand.u32 %v189, 15
        %v192 = vsub.s32 0, %v191
        %v193 = vsel %vm187, %v192, %v191
        %vm194 = vcmp.ne.s32.totalorder %v186, 0
        %vm195 = vcmp.ne.s32.totalorder %v193, 0
        %vm196 = vcmp.lt.s32.totalorder %v186, 0
        %vm197 = vcmp.lt.s32.totalorder %v193, 0
        %vm198 = vmand %vm196, %vm194
        %vm199 = vmand %vm197, %vm195
        %v200 = vadd.s32 %v186, 16
        %v201 = vadd.s32 %v193, 16
        %v202 = vsel %vm198, %v200, %v186
        %v203 = vsel %vm199, %v201, %v193
        %vm204 = vcmp.ge.s32.totalorder %v202, 1
        %vm205 = vcmp.ge.s32.totalorder %v203, 1
        %vm206 = vcmp.le.s32.totalorder %v202, 14
        %vm207 = vcmp.le.s32.totalorder %v203, 14
        %v208 = vld [vmem:[%s150] sm:$0xff]
        %v209 = vld [vmem:[%s150 + $0x8] sm:$0xff]
        %v210 = vld [vmem:[%s150 + $0x10] sm:$0xff]
        %v211 = vld [vmem:[%s150 + $0x18] sm:$0xff]
        %v212 = vld [vmem:[%s150 + $0x20] sm:$0xff]
        %v213 = vld [vmem:[%s150 + $0x28] sm:$0xff]
        %220 = vrot.lane.b32.xlu0 %v208, 112
        %v221 = vpop.permute.xlu0 %220
        %222 = vrot.lane.b32.xlu0 %v209, 112
        %v223 = vpop.permute.xlu0 %222
        %224 = vrot.lane.b32.xlu0 %v210, 112
        %v225 = vpop.permute.xlu0 %224
        %226 = vrot.lane.b32.xlu0 %v211, 112
        %v227 = vpop.permute.xlu0 %226
        %228 = vrot.lane.b32.xlu0 %v212, 112
        %v229 = vpop.permute.xlu0 %228
        %230 = vrot.lane.b32.xlu0 %v213, 112
        %v231 = vpop.permute.xlu0 %230
        %vm232 = vcmask 916480
        %v233 = vsel %vm232, %v221, %v223
        %v234 = vsel %vm232, %v223, %v225
        %v235 = vsel %vm232, %v227, %v229
        %v236 = vsel %vm232, %v229, %v231
        %241 = vrot.lane.b32.xlu0 %v208, 96
        %v242 = vpop.permute.xlu0 %241
        %243 = vrot.lane.b32.xlu0 %v209, 96
        %v244 = vpop.permute.xlu0 %243
        %245 = vrot.lane.b32.xlu0 %v210, 96
        %v246 = vpop.permute.xlu0 %245
        %247 = vrot.lane.b32.xlu0 %v211, 96
        %v248 = vpop.permute.xlu0 %247
        %249 = vrot.lane.b32.xlu0 %v212, 96
        %v250 = vpop.permute.xlu0 %249
        %251 = vrot.lane.b32.xlu0 %v213, 96
        %v252 = vpop.permute.xlu0 %251
        %vm253 = vcmask 785408
        %v254 = vsel %vm253, %v242, %v244
        %v255 = vsel %vm253, %v244, %v246
        %v256 = vsel %vm253, %v248, %v250
        %v257 = vsel %vm253, %v250, %v252
        %v262 = vsel %vm204, 1, 0
        %v263 = vsel %vm205, 1, 0
        %vm264 = vcmp.eq.s32.totalorder %v262, 1
        %vm265 = vcmp.eq.s32.totalorder %v263, 1
        %v266 = vsel %vm264, %v208, 0.0
        %v267 = vsel %vm265, %v209, 0.0
        %v268 = vsel %vm264, %v211, 0.0
        %v269 = vsel %vm265, %v212, 0.0
        %v270 = vsel %vm264, %v233, 0.0
        %v271 = vsel %vm265, %v234, 0.0
        %v272 = vsel %vm264, %v235, 0.0
        %v273 = vsel %vm265, %v236, 0.0
        %v274 = vsel %vm264, %v254, 0.0
        %v275 = vsel %vm265, %v255, 0.0
        %v276 = vsel %vm264, %v256, 0.0
        %v277 = vsel %vm265, %v257, 0.0
        %279 = vrot.lane.b32.xlu0 %v175, 80
        %v280 = vpop.permute.xlu0 %279
        %281 = vrot.lane.b32.xlu0 %v208, 127
        %v282 = vpop.permute.xlu0 %281
        %283 = vrot.lane.b32.xlu0 %v209, 127
        %v284 = vpop.permute.xlu0 %283
        %285 = vrot.lane.b32.xlu0 %v210, 127
        %v286 = vpop.permute.xlu0 %285
        %287 = vrot.lane.b32.xlu0 %v211, 127
        %v288 = vpop.permute.xlu0 %287
        %289 = vrot.lane.b32.xlu0 %v212, 127
        %v290 = vpop.permute.xlu0 %289
        %291 = vrot.lane.b32.xlu0 %v213, 127
        %v292 = vpop.permute.xlu0 %291
        %293 = vrot.lane.b32.xlu0 %v233, 127
        %v294 = vpop.permute.xlu0 %293
        %295 = vrot.lane.b32.xlu0 %v234, 127
        %v296 = vpop.permute.xlu0 %295
        %297 = vrot.lane.b32.xlu0 %v225, 127
        %v298 = vpop.permute.xlu0 %297
        %299 = vrot.lane.b32.xlu0 %v235, 127
        %v300 = vpop.permute.xlu0 %299
        %301 = vrot.lane.b32.xlu0 %v236, 127
        %v302 = vpop.permute.xlu0 %301
        %303 = vrot.lane.b32.xlu0 %v231, 127
        %v304 = vpop.permute.xlu0 %303
        %305 = vrot.lane.b32.xlu0 %v254, 127
        %v306 = vpop.permute.xlu0 %305
        %307 = vrot.lane.b32.xlu0 %v255, 127
        %v308 = vpop.permute.xlu0 %307
        %309 = vrot.lane.b32.xlu0 %v246, 127
        %v310 = vpop.permute.xlu0 %309
        %311 = vrot.lane.b32.xlu0 %v256, 127
        %v312 = vpop.permute.xlu0 %311
        %313 = vrot.lane.b32.xlu0 %v257, 127
        %v314 = vpop.permute.xlu0 %313
        %315 = vrot.lane.b32.xlu0 %v252, 127
        %v316 = vpop.permute.xlu0 %315
        %vm317 = vcmask 1039360
        %v318 = vsel %vm317, %v282, %v284
        %v319 = vsel %vm317, %v284, %v286
        %v320 = vsel %vm317, %v288, %v290
        %v321 = vsel %vm317, %v290, %v292
        %v322 = vsel %vm317, %v294, %v296
        %v323 = vsel %vm317, %v296, %v298
        %v324 = vsel %vm317, %v300, %v302
        %v325 = vsel %vm317, %v302, %v304
        %v326 = vsel %vm317, %v306, %v308
        %v327 = vsel %vm317, %v308, %v310
        %v328 = vsel %vm317, %v312, %v314
        %v329 = vsel %vm317, %v314, %v316
        %vm342 = vcmask 392192
        %v343 = vsel %vm342, %v280, 0
        %345 = vmatprep.subr.mxu0 %v319
        %346 = vmatpush1.msra.mxu0 %v318
        %347 = vmatprep.subr.mxu0 %v321
        %348 = vmatpush1.msra.mxu0 %v320
        %349 = vmatprep.subr.mxu0 %v323
        %350 = vmatpush1.msra.mxu0 %v322
        %351 = vmatprep.subr.mxu0 %v325
        %352 = vmatpush1.msra.mxu0 %v324
        %353 = vmatprep.subr.mxu0 %v327
        %354 = vmatpush1.msra.mxu0 %v326
        %355 = vmatprep.subr.mxu0 %v329
        %356 = vmatpush1.msra.mxu0 %v328
        %357 = vmatprep.subr.mxu0 0.0
        %358 = vmatpush1.msra.mxu0 0.0
        %359 = vmatprep.subr.mxu0 0.0
        %360 = vmatpush1.msra.mxu0 0.0
        %361 = vmatprep.subr.mxu0 0.0
        %362 = vmatpush1.msra.mxu0 0.0
        %363 = vmatprep.subr.mxu0 0.0
        %364 = vmatpush1.msra.mxu0 0.0
        %365 = vmatprep.subr.mxu0 0.0
        %366 = vmatpush1.msra.mxu0 0.0
        %367 = vmatprep.subr.mxu0 0.0
        %368 = vmatpush1.msra.mxu0 0.0
        %369 = vmatprep.subr.mxu0 0.0
        %370 = vmatpush1.msra.mxu0 0.0
        %371 = vmatprep.subr.mxu0 0.0
        %372 = vmatpush1.msra.mxu0 0.0
        %373 = vmatprep.subr.mxu0 0.0
        %374 = vmatpush1.msra.mxu0 0.0
        %375 = vmatprep.subr.mxu0 0.0
        %376 = vmatpush1.msra.mxu0 0.0
        %377 = vmatprep.subr.mxu0 0.0
        %378 = vmatpush1.msra.mxu0 0.0
        %379 = vmatprep.subr.mxu0 0.0
        %380 = vmatpush1.msra.mxu0 0.0
        %381 = vmatprep.subr.mxu0 0.0
        %382 = vmatpush1.msra.mxu0 0.0
        %383 = vmatprep.subr.mxu0 0.0
        %384 = vmatpush1.msra.mxu0 0.0
        %385 = vmatprep.subr.mxu0 0.0
        %386 = vmatpush1.msra.mxu0 0.0
        %387 = vmatprep.subr.mxu0 0.0
        %388 = vmatpush1.msra.mxu0 0.0
        %389 = vmatprep.subr.mxu0 0.0
        %390 = vmatpush1.msra.mxu0 0.0
        %391 = vmatprep.subr.mxu0 0.0
        %392 = vmatpush1.msra.mxu0 0.0
        %393 = vmatprep.subr.mxu0 0.0
        %394 = vmatpush1.msra.mxu0 0.0
        %395 = vmatprep.subr.mxu0 0.0
        %396 = vmatpush1.msra.mxu0 0.0
        %397 = vmatprep.subr.mxu0 0.0
        %398 = vmatpush1.msra.mxu0 0.0
        %399 = vmatprep.subr.mxu0 0.0
        %400 = vmatpush1.msra.mxu0 0.0
        %401 = vmatprep.subr.mxu0 0.0
        %402 = vmatpush1.msra.mxu0 0.0
        %403 = vmatprep.subr.mxu0 0.0
        %404 = vmatpush1.msra.mxu0 0.0
        %405 = vmatprep.subr.mxu0 0.0
        %406 = vmatpush1.msra.mxu0 0.0
        %407 = vmatprep.subr.mxu0 0.0
        %408 = vmatpush1.msra.mxu0 0.0
        %409 = vmatprep.mubr.f32.mxu0 0.0
        %410 = vmatmul.mubr.f32.gmra.mrb[0].mxu0 %v343
        %v411 = vpop.f32.mrb[0].mxu0
        %v412 = vadd.f32 0.0, %v411
        %v413 = vpop.f32.mrb[0].mxu0
        %v414 = vadd.f32 0.0, %v413
        %415 = vdwg.mxu0
        %v416 = vsel %vm342, %v175, 0
        %418 = vmatprep.subr.mxu0 %v267
        %419 = vmatpush1.msra.mxu0 %v266
        %420 = vmatprep.subr.mxu0 %v269
        %421 = vmatpush1.msra.mxu0 %v268
        %422 = vmatprep.subr.mxu0 %v271
        %423 = vmatpush1.msra.mxu0 %v270
        %424 = vmatprep.subr.mxu0 %v273
        %425 = vmatpush1.msra.mxu0 %v272
        %426 = vmatprep.subr.mxu0 %v275
        %427 = vmatpush1.msra.mxu0 %v274
        %428 = vmatprep.subr.mxu0 %v277
        %429 = vmatpush1.msra.mxu0 %v276
        %430 = vmatprep.subr.mxu0 0.0
        %431 = vmatpush1.msra.mxu0 0.0
        %432 = vmatprep.subr.mxu0 0.0
        %433 = vmatpush1.msra.mxu0 0.0
        %434 = vmatprep.subr.mxu0 0.0
        %435 = vmatpush1.msra.mxu0 0.0
        %436 = vmatprep.subr.mxu0 0.0
        %437 = vmatpush1.msra.mxu0 0.0
        %438 = vmatprep.subr.mxu0 0.0
        %439 = vmatpush1.msra.mxu0 0.0
        %440 = vmatprep.subr.mxu0 0.0
        %441 = vmatpush1.msra.mxu0 0.0
        %442 = vmatprep.subr.mxu0 0.0
        %443 = vmatpush1.msra.mxu0 0.0
        %444 = vmatprep.subr.mxu0 0.0
        %445 = vmatpush1.msra.mxu0 0.0
        %446 = vmatprep.subr.mxu0 0.0
        %447 = vmatpush1.msra.mxu0 0.0
        %448 = vmatprep.subr.mxu0 0.0
        %449 = vmatpush1.msra.mxu0 0.0
        %450 = vmatprep.subr.mxu0 0.0
        %451 = vmatpush1.msra.mxu0 0.0
        %452 = vmatprep.subr.mxu0 0.0
        %453 = vmatpush1.msra.mxu0 0.0
        %454 = vmatprep.subr.mxu0 0.0
        %455 = vmatpush1.msra.mxu0 0.0
        %456 = vmatprep.subr.mxu0 0.0
        %457 = vmatpush1.msra.mxu0 0.0
        %458 = vmatprep.subr.mxu0 0.0
        %459 = vmatpush1.msra.mxu0 0.0
        %460 = vmatprep.subr.mxu0 0.0
        %461 = vmatpush1.msra.mxu0 0.0
        %462 = vmatprep.subr.mxu0 0.0
        %463 = vmatpush1.msra.mxu0 0.0
        %464 = vmatprep.subr.mxu0 0.0
        %465 = vmatpush1.msra.mxu0 0.0
        %466 = vmatprep.subr.mxu0 0.0
        %467 = vmatpush1.msra.mxu0 0.0
        %468 = vmatprep.subr.mxu0 0.0
        %469 = vmatpush1.msra.mxu0 0.0
        %470 = vmatprep.subr.mxu0 0.0
        %471 = vmatpush1.msra.mxu0 0.0
        %472 = vmatprep.subr.mxu0 0.0
        %473 = vmatpush1.msra.mxu0 0.0
        %474 = vmatprep.subr.mxu0 0.0
        %475 = vmatpush1.msra.mxu0 0.0
        %476 = vmatprep.subr.mxu0 0.0
        %477 = vmatpush1.msra.mxu0 0.0
        %478 = vmatprep.subr.mxu0 0.0
        %479 = vmatpush1.msra.mxu0 0.0
        %480 = vmatprep.subr.mxu0 0.0
        %481 = vmatpush1.msra.mxu0 0.0
        %482 = vmatprep.mubr.f32.mxu0 0.0
        %483 = vmatmul.mubr.f32.gmra.mrb[0].mxu0 %v416
        %v484 = vpop.f32.mrb[0].mxu0
        %v485 = vadd.f32 %v412, %v484
        %v486 = vpop.f32.mrb[0].mxu0
        %v487 = vadd.f32 %v414, %v486
        %488 = vdwg.mxu0
        %v489 = vsel %vm206, 1, 0
        %v490 = vsel %vm207, 1, 0
        %vm491 = vcmp.eq.s32.totalorder %v489, 1
        %vm492 = vcmp.eq.s32.totalorder %v490, 1
        %493 = vrot.lane.b32.xlu0 %v208, 126
        %v494 = vpop.permute.xlu0 %493
        %495 = vrot.lane.b32.xlu0 %v209, 126
        %v496 = vpop.permute.xlu0 %495
        %497 = vrot.lane.b32.xlu0 %v210, 126
        %v498 = vpop.permute.xlu0 %497
        %499 = vrot.lane.b32.xlu0 %v211, 126
        %v500 = vpop.permute.xlu0 %499
        %501 = vrot.lane.b32.xlu0 %v212, 126
        %v502 = vpop.permute.xlu0 %501
        %503 = vrot.lane.b32.xlu0 %v213, 126
        %v504 = vpop.permute.xlu0 %503
        %505 = vrot.lane.b32.xlu0 %v233, 126
        %v506 = vpop.permute.xlu0 %505
        %507 = vrot.lane.b32.xlu0 %v234, 126
        %v508 = vpop.permute.xlu0 %507
        %509 = vrot.lane.b32.xlu0 %v225, 126
        %v510 = vpop.permute.xlu0 %509
        %511 = vrot.lane.b32.xlu0 %v235, 126
        %v512 = vpop.permute.xlu0 %511
        %513 = vrot.lane.b32.xlu0 %v236, 126
        %v514 = vpop.permute.xlu0 %513
        %515 = vrot.lane.b32.xlu0 %v231, 126
        %v516 = vpop.permute.xlu0 %515
        %517 = vrot.lane.b32.xlu0 %v254, 126
        %v518 = vpop.permute.xlu0 %517
        %519 = vrot.lane.b32.xlu0 %v255, 126
        %v520 = vpop.permute.xlu0 %519
        %521 = vrot.lane.b32.xlu0 %v246, 126
        %v522 = vpop.permute.xlu0 %521
        %523 = vrot.lane.b32.xlu0 %v256, 126
        %v524 = vpop.permute.xlu0 %523
        %525 = vrot.lane.b32.xlu0 %v257, 126
        %v526 = vpop.permute.xlu0 %525
        %527 = vrot.lane.b32.xlu0 %v252, 126
        %v528 = vpop.permute.xlu0 %527
        %vm529 = vcmask 1031168
        %v530 = vsel %vm529, %v494, %v496
        %v531 = vsel %vm529, %v496, %v498
        %v532 = vsel %vm529, %v500, %v502
        %v533 = vsel %vm529, %v502, %v504
        %v534 = vsel %vm529, %v506, %v508
        %v535 = vsel %vm529, %v508, %v510
        %v536 = vsel %vm529, %v512, %v514
        %v537 = vsel %vm529, %v514, %v516
        %v538 = vsel %vm529, %v518, %v520
        %v539 = vsel %vm529, %v520, %v522
        %v540 = vsel %vm529, %v524, %v526
        %v541 = vsel %vm529, %v526, %v528
        %v554 = vsel %vm491, %v530, 0.0
        %v555 = vsel %vm492, %v531, 0.0
        %v556 = vsel %vm491, %v532, 0.0
        %v557 = vsel %vm492, %v533, 0.0
        %v558 = vsel %vm491, %v534, 0.0
        %v559 = vsel %vm492, %v535, 0.0
        %v560 = vsel %vm491, %v536, 0.0
        %v561 = vsel %vm492, %v537, 0.0
        %v562 = vsel %vm491, %v538, 0.0
        %v563 = vsel %vm492, %v539, 0.0
        %v564 = vsel %vm491, %v540, 0.0
        %v565 = vsel %vm492, %v541, 0.0
        %567 = vrot.lane.b32.xlu0 %v175, 32
        %v568 = vpop.permute.xlu0 %567
        %569 = vrot.lane.b32.xlu0 %v176, 32
        %v570 = vpop.permute.xlu0 %569
        %vm571 = vcmask 261120
        %v572 = vsel %vm571, %v568, %v570
        %v573 = vsel %vm342, %v572, 0
        %575 = vmatprep.subr.mxu0 %v555
        %576 = vmatpush1.msra.mxu0 %v554
        %577 = vmatprep.subr.mxu0 %v557
        %578 = vmatpush1.msra.mxu0 %v556
        %579 = vmatprep.subr.mxu0 %v559
        %580 = vmatpush1.msra.mxu0 %v558
        %581 = vmatprep.subr.mxu0 %v561
        %582 = vmatpush1.msra.mxu0 %v560
        %583 = vmatprep.subr.mxu0 %v563
        %584 = vmatpush1.msra.mxu0 %v562
        %585 = vmatprep.subr.mxu0 %v565
        %586 = vmatpush1.msra.mxu0 %v564
        %587 = vmatprep.subr.mxu0 0.0
        %588 = vmatpush1.msra.mxu0 0.0
        %589 = vmatprep.subr.mxu0 0.0
        %590 = vmatpush1.msra.mxu0 0.0
        %591 = vmatprep.subr.mxu0 0.0
        %592 = vmatpush1.msra.mxu0 0.0
        %593 = vmatprep.subr.mxu0 0.0
        %594 = vmatpush1.msra.mxu0 0.0
        %595 = vmatprep.subr.mxu0 0.0
        %596 = vmatpush1.msra.mxu0 0.0
        %597 = vmatprep.subr.mxu0 0.0
        %598 = vmatpush1.msra.mxu0 0.0
        %599 = vmatprep.subr.mxu0 0.0
        %600 = vmatpush1.msra.mxu0 0.0
        %601 = vmatprep.subr.mxu0 0.0
        %602 = vmatpush1.msra.mxu0 0.0
        %603 = vmatprep.subr.mxu0 0.0
        %604 = vmatpush1.msra.mxu0 0.0
        %605 = vmatprep.subr.mxu0 0.0
        %606 = vmatpush1.msra.mxu0 0.0
        %607 = vmatprep.subr.mxu0 0.0
        %608 = vmatpush1.msra.mxu0 0.0
        %609 = vmatprep.subr.mxu0 0.0
        %610 = vmatpush1.msra.mxu0 0.0
        %611 = vmatprep.subr.mxu0 0.0
        %612 = vmatpush1.msra.mxu0 0.0
        %613 = vmatprep.subr.mxu0 0.0
        %614 = vmatpush1.msra.mxu0 0.0
        %615 = vmatprep.subr.mxu0 0.0
        %616 = vmatpush1.msra.mxu0 0.0
        %617 = vmatprep.subr.mxu0 0.0
        %618 = vmatpush1.msra.mxu0 0.0
        %619 = vmatprep.subr.mxu0 0.0
        %620 = vmatpush1.msra.mxu0 0.0
        %621 = vmatprep.subr.mxu0 0.0
        %622 = vmatpush1.msra.mxu0 0.0
        %623 = vmatprep.subr.mxu0 0.0
        %624 = vmatpush1.msra.mxu0 0.0
        %625 = vmatprep.subr.mxu0 0.0
        %626 = vmatpush1.msra.mxu0 0.0
        %627 = vmatprep.subr.mxu0 0.0
        %628 = vmatpush1.msra.mxu0 0.0
        %629 = vmatprep.subr.mxu0 0.0
        %630 = vmatpush1.msra.mxu0 0.0
        %631 = vmatprep.subr.mxu0 0.0
        %632 = vmatpush1.msra.mxu0 0.0
        %633 = vmatprep.subr.mxu0 0.0
        %634 = vmatpush1.msra.mxu0 0.0
        %635 = vmatprep.subr.mxu0 0.0
        %636 = vmatpush1.msra.mxu0 0.0
        %637 = vmatprep.subr.mxu0 0.0
        %638 = vmatpush1.msra.mxu0 0.0
        %639 = vmatprep.mubr.f32.mxu0 0.0
        %640 = vmatmul.mubr.f32.gmra.mrb[0].mxu0 %v573
        %v641 = vpop.f32.mrb[0].mxu0
        %v642 = vadd.f32 0.0, %v641
        %v643 = vpop.f32.mrb[0].mxu0
        %v644 = vadd.f32 0.0, %v643
        %645 = vdwg.mxu0
        %v646 = vadd.f32 %v485, %v642
        %v647 = vadd.f32 %v487, %v644
        %648 = vset.pattern.permute.xlu0 24
        %649 = vperm.xlu0 %648, %v176
        %v650 = vpop.permute.xlu0 %649
        %v652 = vadd.f32 %v646, %v650
        %v653 = vadd.f32 %v647, %v650
        %v654 = vadd.f32 %v652, %v653
        %655 = vadd.xlane.f32.xlu0 %v654
        %v656 = vpop.xlane.xlu0 %655
        %vm657 = vcmask 1041408
        %v658 = vsel %vm657, %v656, 0.0
        %v659 = vrot.slane %v658, 4
        %v660 = vadd.f32 %v658, %v659
        %v661 = vrot.slane %v660, 2
        %v662 = vadd.f32 %v660, %v661
        %v663 = vrot.slane %v662, 1
        %v664 = vadd.f32 %v662, %v663
        %v666 = vrot.slane %v656, 2
        %v668 = vsel %vm657, %v666, 0.0
        %v669 = vrot.slane %v668, 4
        %v670 = vadd.f32 %v668, %v669
        %v671 = vrot.slane %v670, 2
        %v672 = vadd.f32 %v670, %v671
        %v673 = vrot.slane %v672, 1
        %v674 = vadd.f32 %v672, %v673
        %v675 = vrot.slane %v656, 4
        %v677 = vsel %vm657, %v675, 0.0
        %v678 = vrot.slane %v677, 4
        %v679 = vadd.f32 %v677, %v678
        %v680 = vrot.slane %v679, 2
        %v681 = vadd.f32 %v679, %v680
        %v682 = vrot.slane %v681, 1
        %v683 = vadd.f32 %v681, %v682
        %v684 = vrot.slane %v656, 6
        %v686 = vsel %vm657, %v684, 0.0
        %v687 = vrot.slane %v686, 4
        %v688 = vadd.f32 %v686, %v687
        %v689 = vrot.slane %v688, 2
        %v690 = vadd.f32 %v688, %v689
        %v691 = vrot.slane %v690, 1
        %v692 = vadd.f32 %v690, %v691
        %v693 = vsel %vm657, %v664, %v674
        %vm694 = vcmask 1042432
        %v695 = vsel %vm694, %v693, %v674
        %vm696 = vcmask 1043456
        %v697 = vsel %vm696, %v695, %v683
        %vm698 = vcmask 1044480
        %v699 = vsel %vm698, %v697, %v683
        %vm700 = vcmask 1045504
        %v701 = vsel %vm700, %v699, %v692
        %vm702 = vcmask 1046528
        %v703 = vsel %vm702, %v701, %v692
        %v704 = vmul.f32 %v703, 0.001953125
        %706 = vset.pattern.permute.xlu0 0
        %707 = vperm.xlu0 %706, %v704
        %v708 = vpop.permute.xlu0 %707
        %v710 = vsub.f32 %v652, %v708
        %v711 = vsub.f32 %v653, %v708
        %v712 = vmul.f32 %v710, %v710
        %v713 = vmul.f32 %v711, %v711
        %v714 = vadd.f32 %v712, %v713
        %715 = vadd.xlane.f32.xlu0 %v714
        %v716 = vpop.xlane.xlu0 %715
        %v717 = vsel %vm657, %v716, 0.0
        %v718 = vrot.slane %v717, 4
        %v719 = vadd.f32 %v717, %v718
        %v720 = vrot.slane %v719, 2
        %v721 = vadd.f32 %v719, %v720
        %v722 = vrot.slane %v721, 1
        %v723 = vadd.f32 %v721, %v722
        %v725 = vrot.slane %v716, 2
        %v727 = vsel %vm657, %v725, 0.0
        %v728 = vrot.slane %v727, 4
        %v729 = vadd.f32 %v727, %v728
        %v730 = vrot.slane %v729, 2
        %v731 = vadd.f32 %v729, %v730
        %v732 = vrot.slane %v731, 1
        %v733 = vadd.f32 %v731, %v732
        %v734 = vrot.slane %v716, 4
        %v736 = vsel %vm657, %v734, 0.0
        %v737 = vrot.slane %v736, 4
        %v738 = vadd.f32 %v736, %v737
        %v739 = vrot.slane %v738, 2
        %v740 = vadd.f32 %v738, %v739
        %v741 = vrot.slane %v740, 1
        %v742 = vadd.f32 %v740, %v741
        %v743 = vrot.slane %v716, 6
        %v745 = vsel %vm657, %v743, 0.0
        %v746 = vrot.slane %v745, 4
        %v747 = vadd.f32 %v745, %v746
        %v748 = vrot.slane %v747, 2
        %v749 = vadd.f32 %v747, %v748
        %v750 = vrot.slane %v749, 1
        %v751 = vadd.f32 %v749, %v750
        %v752 = vsel %vm657, %v723, %v733
        %v753 = vsel %vm694, %v752, %v733
        %v754 = vsel %vm696, %v753, %v742
        %v755 = vsel %vm698, %v754, %v742
        %v756 = vsel %vm700, %v755, %v751
        %v757 = vsel %vm702, %v756, %v751
        %v758 = vmul.f32 %v757, 0.001953125
        %v759 = vadd.f32 %v758, 1e-05
        %v760 = vrsqrt.pop %v759
        %762 = vrot.lane.b32.xlu0 %v760, 25
        %v763 = vpop.permute.xlu0 %762
        %v765 = vmul.f32 %v176, %v763
        %767 = vset.pattern.permute.xlu0 25
        %768 = vperm.xlu0 %767, %v765
        %v769 = vpop.permute.xlu0 %768
        %v771 = vmul.f32 %v710, %v769
        %v772 = vmul.f32 %v711, %v769
        %773 = vset.pattern.permute.xlu0 26
        %774 = vperm.xlu0 %773, %v176
        %v775 = vpop.permute.xlu0 %774
        %v777 = vadd.f32 %v771, %v775
        %v778 = vadd.f32 %v772, %v775
        %v779 = vmax.f32 %v777, 0.0
        %v780 = vmax.f32 %v778, 0.0
        %v781 = vadd.f32 %v779, %v780
        %782 = vadd.xlane.f32.xlu0 %v781
        %v783 = vpop.xlane.xlu0 %782
        %v784 = vmul.f32 %v783, 0.00390625
        %785 = vrot.lane.b32.xlu0 %v176, 112
        %v786 = vpop.permute.xlu0 %785
        %787 = vrot.lane.b32.xlu0 %v176, 101
        %v788 = vpop.permute.xlu0 %787
        %vm790 = vcmask 64512
        %v791 = vsel %vm790, %v786, 0
        %793 = vmatprep.subr.mxu0 0.0
        %794 = vmatpush1.msra.mxu0 %v784
        %795 = vmatprep.subr.mxu0 0.0
        %796 = vmatpush1.msra.mxu0 0.0
        %797 = vmatprep.subr.mxu0 0.0
        %798 = vmatpush1.msra.mxu0 0.0
        %799 = vmatprep.subr.mxu0 0.0
        %800 = vmatpush1.msra.mxu0 0.0
        %801 = vmatprep.subr.mxu0 0.0
        %802 = vmatpush1.msra.mxu0 0.0
        %803 = vmatprep.subr.mxu0 0.0
        %804 = vmatpush1.msra.mxu0 0.0
        %805 = vmatprep.subr.mxu0 0.0
        %806 = vmatpush1.msra.mxu0 0.0
        %807 = vmatprep.subr.mxu0 0.0
        %808 = vmatpush1.msra.mxu0 0.0
        %809 = vmatprep.subr.mxu0 0.0
        %810 = vmatpush1.msra.mxu0 0.0
        %811 = vmatprep.subr.mxu0 0.0
        %812 = vmatpush1.msra.mxu0 0.0
        %813 = vmatprep.subr.mxu0 0.0
        %814 = vmatpush1.msra.mxu0 0.0
        %815 = vmatprep.subr.mxu0 0.0
        %816 = vmatpush1.msra.mxu0 0.0
        %817 = vmatprep.subr.mxu0 0.0
        %818 = vmatpush1.msra.mxu0 0.0
        %819 = vmatprep.subr.mxu0 0.0
        %820 = vmatpush1.msra.mxu0 0.0
        %821 = vmatprep.subr.mxu0 0.0
        %822 = vmatpush1.msra.mxu0 0.0
        %823 = vmatprep.subr.mxu0 0.0
        %824 = vmatpush1.msra.mxu0 0.0
        %825 = vmatprep.subr.mxu0 0.0
        %826 = vmatpush1.msra.mxu0 0.0
        %827 = vmatprep.subr.mxu0 0.0
        %828 = vmatpush1.msra.mxu0 0.0
        %829 = vmatprep.subr.mxu0 0.0
        %830 = vmatpush1.msra.mxu0 0.0
        %831 = vmatprep.subr.mxu0 0.0
        %832 = vmatpush1.msra.mxu0 0.0
        %833 = vmatprep.subr.mxu0 0.0
        %834 = vmatpush1.msra.mxu0 0.0
        %835 = vmatprep.subr.mxu0 0.0
        %836 = vmatpush1.msra.mxu0 0.0
        %837 = vmatprep.subr.mxu0 0.0
        %838 = vmatpush1.msra.mxu0 0.0
        %839 = vmatprep.subr.mxu0 0.0
        %840 = vmatpush1.msra.mxu0 0.0
        %841 = vmatprep.subr.mxu0 0.0
        %842 = vmatpush1.msra.mxu0 0.0
        %843 = vmatprep.subr.mxu0 0.0
        %844 = vmatpush1.msra.mxu0 0.0
        %845 = vmatprep.subr.mxu0 0.0
        %846 = vmatpush1.msra.mxu0 0.0
        %847 = vmatprep.subr.mxu0 0.0
        %848 = vmatpush1.msra.mxu0 0.0
        %849 = vmatprep.subr.mxu0 0.0
        %850 = vmatpush1.msra.mxu0 0.0
        %851 = vmatprep.subr.mxu0 0.0
        %852 = vmatpush1.msra.mxu0 0.0
        %853 = vmatprep.subr.mxu0 0.0
        %854 = vmatpush1.msra.mxu0 0.0
        %855 = vmatprep.subr.mxu0 0.0
        %856 = vmatpush1.msra.mxu0 0.0
        %857 = vmatprep.mubr.f32.mxu0 0.0
        %858 = vmatmul.mubr.f32.gmra.mrb[0].mxu0 %v791
        %v859 = vpop.f32.mrb[0].mxu0
        %v860 = vadd.f32 %v788, %v859
        %v861 = vpop.f32.mrb[0].mxu0
        %862 = vdwg.mxu0
        %v863 = vxor.u32 %v860, 2147483648
        %v864 = vmul.f32 %v863, 1.442695
        %v865 = vpow.pop %v864
        %v866 = vadd.f32 %v865, 1.0
        %v867 = vrcp.pop %v866
        %v868 = vmul.f32 1.0, %v867
        %870 = vset.pattern.permute.xlu0 0
        %871 = vperm.xlu0 %870, %v868
        %v872 = vpop.permute.xlu0 %871
        %v874 = vmul.f32 %v779, %v872
        %v875 = vmul.f32 %v780, %v872
        %876 = vst [vmem:[%s174] sm:$0xff] %v874
        %877 = vst [vmem:[%s174 + $0x8] sm:$0xff] %v875
        %s878 = sand.u32 %s75, 1
        %s879 = scalar_lea.sflag [#allocation4], %s878
        %s880 = sand.u32 %s75, 1
        %s881 = smul.addr %s880, 16
        %s882 = scalar_lea.vmem [#allocation7], %s881
        // Predicated region
        $region37: #{tpu_custom_call.1} parent=27 // pred_check
          %p883 = pneg %p85
        $region38: #{tpu_custom_call.1} parent=27 // pred_check_branch
          %885 = sbr.rel (%p883) target = $region40
        $region39: #{tpu_custom_call.1} parent=27 // pred_region
          %s887 = ssub.s32 256, 256
          %888 = vsyncadd %s879, %s887
          %s889 = smul.addr %s20, 2
          %s890 = smul.addr %s889, 128
          %s891 = scalar_lea.hbm %s2, %s890
          %s893 = sshll.u32 %s882, 4
          %s894 = int_to_ptr.vmem [resolvable:$true] %s893
          %896 = dma.vmem_to_hbm [thread:$0]  %s894, 256, %s891, %s879
        $region40: #{tpu_custom_call.1} parent=27 // pred_fallthru
          _
      $region28: #{tpu_custom_call.1} parent=5 // pred_fallthru
        _
      %p897 = scmp.le.s32.totalorder 2, %s15
      // Predicated region
      $region41: #{tpu_custom_call.1} parent=5 // pred_check
        %p898 = pneg %p897
      $region42: #{tpu_custom_call.1} parent=5 // pred_check_branch
        %900 = sbr.rel (%p898) target = $region44
      $region43: #{tpu_custom_call.1} parent=5 // pred_region
        %s901 = ssub.s32 %s15, 2
        // Predicated region
        $region45: #{tpu_custom_call.1} parent=43 // pred_check
          %p902 = pneg %p91
        $region46: #{tpu_custom_call.1} parent=43 // pred_check_branch
          %904 = sbr.rel (%p902) target = $region48
        $region47: #{tpu_custom_call.1} parent=43 // pred_region
          %s905 = sand.u32 %s76, 1
          %s906 = scalar_lea.sflag [#allocation4], %s905
          %s907 = sand.u32 %s76, 1
          %s908 = smul.addr %s907, 16
          %s909 = scalar_lea.vmem [#allocation7], %s908
          %910 = dma.done %s906, 256
        $region48: #{tpu_custom_call.1} parent=43 // pred_fallthru
          _
      $region44: #{tpu_custom_call.1} parent=5 // pred_fallthru
        _
    $region6: #{tpu_custom_call.1} parent=1 // loop_footer
      %s19 = sadd.s32 1, %s15
    $region7: #{tpu_custom_call.1} parent=1 // loop_footer_branch
      %14 = sbr.rel target = $region3
    $region8: #{tpu_custom_call.1} parent=1 // loop_exit
      _
    %911 = vsyncpa [#allocation3], 1
    %s912 = scalar_lea.sflag [#allocation3], 1
    %913 = vsyncpa %s912, 1
    %914 = vsyncpa [#allocation6], 1
    %915 = vsyncpa [#allocation4], 1
    %s916 = scalar_lea.sflag [#allocation4], 1
    %917 = vsyncpa %s916, 1

</llo_original>
